<compile_context>
chip_gen: v5e
topology: v5e:2x2
jax: 0.10.0
libtpu: 0.0.40
codegen_flags: <defaults>
</compile_context>

<pallas_src>
import functools
import math

import jax
import jax.numpy as jnp
from jax.experimental import pallas as pl
from jax.experimental.pallas import tpu as pltpu


def make_positional_encoding(d_model: int, max_len: int = 5000,
                             dtype=jnp.float32) -> jnp.ndarray:
    """Sinusoidal PE table, shape (max_len, d_model) (== torch pe[:, 0, :]).

    Build this ONCE in the model dtype and reuse it (avoids a per-call cast pass).
    """
    position = jnp.arange(max_len, dtype=jnp.float32)[:, None]               # (L, 1)
    div_term = jnp.exp(
        jnp.arange(0, d_model, 2, dtype=jnp.float32) * (-math.log(10000.0) / d_model)
    )                                                                         # (D//2,)
    angles = position * div_term                                              # (L, D//2)
    pe = jnp.zeros((max_len, d_model), dtype=jnp.float32)
    pe = pe.at[:, 0::2].set(jnp.sin(angles))
    pe = pe.at[:, 1::2].set(jnp.cos(angles))
    return pe.astype(dtype)


def _tpu_vmem_and_cores():
    """(per-core VMEM bytes, TensorCores per chip); conservative fallbacks."""
    vmem_cap = 64 * 1024 * 1024            # v7x-sized fallback (safe lower bound)
    num_cores = 2
    try:
        info = pltpu.get_tpu_info()
        cap = getattr(info, "vmem_capacity_bytes", None)
        if cap:
            vmem_cap = int(cap)
        cores = getattr(info, "num_cores", None) or getattr(info, "cores_per_chip", None)
        if cores:
            num_cores = int(cores)
        else:
            # 64 MiB-VMEM parts (v7x) have 2 TCs; 128 MiB parts (v5e/v6e) have 1.
            num_cores = 2 if vmem_cap <= 64 * 1024 * 1024 else 1
    except Exception:
        pass
    return vmem_cap, num_cores


def _choose_row_tile(n_rows: int, live_bytes_per_row: int, x_bytes_per_row: int,
                     vmem_cap: int, num_cores: int) -> int:
    """Row tile (multiple of 8) targeting ~8 MiB x tiles within the VMEM budget."""
    if n_rows <= 8:
        return n_rows                                  # single full-extent block
    # 48 MiB budget on v7x (64 MiB VMEM), 64 MiB on v5e/v6e (128 MiB VMEM).
    budget = min((vmem_cap * 3) // 4, 64 * 1024 * 1024)
    cap = budget // max(live_bytes_per_row, 1)
    cap = min(cap, max(8, (8 * 1024 * 1024) // max(x_bytes_per_row, 1)))  # ~8 MiB x tile
    min_steps = 2 * num_cores                          # >= 2 pipelined steps per TC
    if n_rows >= 8 * min_steps:
        cap = min(cap, pl.cdiv(n_rows, min_steps))
    cap = max(8, min(cap, n_rows))
    return (cap // 8) * 8


def _vmem_limit(live_bytes: int, vmem_cap: int) -> int:
    # Explicit scoped-VMEM limit: v5e's 16 MiB default is too small for the larger
    # tiles; leave headroom for Mosaic internal scratch but stay within capacity.
    return int(min(vmem_cap, max(live_bytes + (4 << 20), 32 << 20)))


def _pe_add_lane_aligned_kernel(x_ref, pe_ref, o_ref, *, batch: int, d_model: int):
    # x_ref / o_ref : (seq_tile, batch * d_model)  lane-dense slab
    # pe_ref        : (seq_tile, d_model)          streamed pe tile
    # d_model % 128 == 0, so every column slice below is 128-lane aligned:
    # unmasked full-width stores, and no (seq_tile, B*D) pe broadcast temporary.
    pe_tile = pe_ref[...]
    for b in range(batch):
        sl = slice(b * d_model, (b + 1) * d_model)
        o_ref[:, sl] = x_ref[:, sl] + pe_tile


def _flat_add_kernel(x_ref, pe_ref, o_ref):
    o_ref[...] = x_ref[...] + pe_ref[...]


def positional_encoding_forward(x: jnp.ndarray, pe_table: jnp.ndarray,
                                *, donate_x: bool = False) -> jnp.ndarray:
    """x: (S, B, D); pe_table: (max_len, D). Returns x + pe[:S] broadcast over B."""
    S, B, D = x.shape
    max_len, Dp = pe_table.shape
    assert Dp == D and max_len >= S
    if pe_table.dtype != x.dtype:
        # Prefer building the table in the model dtype up front; cast is a fallback.
        pe_table = pe_table.astype(x.dtype)
    itemsize = x.dtype.itemsize
    vmem_cap, num_cores = _tpu_vmem_and_cores()
    aliases = {0: 0} if donate_x else {}

    if D % 128 == 0:
        # Lane-aligned path: (S, B*D) slab + streamed (tile, D) pe on a cdiv grid.
        BD = B * D
        x2d = x.reshape(S, BD)                          # free: contiguous view
        live_per_row = (4 * BD + 2 * D) * itemsize      # 2x x, 2x out, 2x pe buffers
        seq_tile = _choose_row_tile(S, live_per_row, BD * itemsize,
                                    vmem_cap, num_cores)
        # Only the tiny S<8 case yields a non-multiple-of-8 tile: slice pe so the
        # pe block equals its full array dims (keeps the (8,128) rule satisfied).
        pe_in = pe_table if seq_tile % 8 == 0 else pe_table[:S]
        grid = (pl.cdiv(S, seq_tile),)
        out2d = pl.pallas_call(
            functools.partial(_pe_add_lane_aligned_kernel, batch=B, d_model=D),
            out_shape=jax.ShapeDtypeStruct((S, BD), x.dtype),
            grid=grid,
            in_specs=[pl.BlockSpec((seq_tile, BD), lambda i: (i, 0)),
                      pl.BlockSpec((seq_tile, D), lambda i: (i, 0))],
            out_specs=pl.BlockSpec((seq_tile, BD), lambda i: (i, 0)),
            input_output_aliases=aliases,
            compiler_params=pltpu.CompilerParams(
                dimension_semantics=("parallel",),
                vmem_limit_bytes=_vmem_limit(live_per_row * seq_tile, vmem_cap)),
        )(x2d, pe_in)
        return out2d.reshape(S, B, D)

    # Unaligned d_model (or tiny B*D): pre-broadcast pe once in the wrapper and run
    # a fully flattened lane-dense add (last dim = 128 -> unmasked full-width vst).
    N = S * B * D
    x_flat = x.reshape(-1)
    pe_flat = jnp.broadcast_to(pe_table[:S, None, :], (S, B, D)).reshape(-1)
    pad = (-N) % 128
    if pad:
        x_flat = jnp.pad(x_flat, (0, pad))
        pe_flat = jnp.pad(pe_flat, (0, pad))
    rows = (N + pad) // 128
    x2d = x_flat.reshape(rows, 128)
    pe2d = pe_flat.reshape(rows, 128)
    live_per_row = 6 * 128 * itemsize                    # 2x x, 2x out, 2x pe buffers
    row_tile = _choose_row_tile(rows, live_per_row, 128 * itemsize,
                                vmem_cap, num_cores)
    out2d = pl.pallas_call(
        _flat_add_kernel,
        out_shape=jax.ShapeDtypeStruct((rows, 128), x.dtype),
        grid=(pl.cdiv(rows, row_tile),),
        in_specs=[pl.BlockSpec((row_tile, 128), lambda i: (i, 0)),
                  pl.BlockSpec((row_tile, 128), lambda i: (i, 0))],
        out_specs=pl.BlockSpec((row_tile, 128), lambda i: (i, 0)),
        input_output_aliases=aliases,
        compiler_params=pltpu.CompilerParams(
            dimension_semantics=("parallel",),
            vmem_limit_bytes=_vmem_limit(live_per_row * row_tile, vmem_cap)),
    )(x2d, pe2d)
    return out2d.reshape(-1)[:N].reshape(S, B, D)


if __name__ == "__main__":
    key = jax.random.PRNGKey(0)

    # Test 1: lane-aligned d_model (multiple of 128) -> per-batch 128-aligned slices.
    S, B, D, MAX_LEN = 16, 2, 128, 64
    x = jax.random.normal(key, (S, B, D), dtype=jnp.float32)
    pe = make_positional_encoding(D, MAX_LEN, dtype=x.dtype)
    ref = x + pe[:S][:, None, :]                        # eval-mode dropout == identity
    out = jax.block_until_ready(positional_encoding_forward(x, pe))
    assert out.shape == (S, B, D)
    assert jnp.allclose(out, ref, atol=1e-6), "mismatch vs reference (test 1)"

    # Test 2: tiny, non-lane-aligned d_model -> flattened lane-dense path.
    S2, B2, D2, MAX_LEN2 = 64, 2, 32, 64
    x2 = jax.random.normal(jax.random.PRNGKey(1), (S2, B2, D2), dtype=jnp.float32)
    pe2 = make_positional_encoding(D2, MAX_LEN2, dtype=x2.dtype)
    ref2 = x2 + pe2[:S2][:, None, :]
    out2 = jax.block_until_ready(positional_encoding_forward(x2, pe2))
    assert out2.shape == (S2, B2, D2)
    assert jnp.allclose(out2, ref2, atol=1e-6), "mismatch vs reference (test 2)"

    # Test 3: ragged S (not a multiple of 8) -> cdiv grid with a clipped last block.
    S3, B3, D3, MAX_LEN3 = 20, 2, 128, 64
    x3 = jax.random.normal(jax.random.PRNGKey(2), (S3, B3, D3), dtype=jnp.float32)
    pe3 = make_positional_encoding(D3, MAX_LEN3, dtype=x3.dtype)
    ref3 = x3 + pe3[:S3][:, None, :]
    out3 = jax.block_until_ready(positional_encoding_forward(x3, pe3))
    assert out3.shape == (S3, B3, D3)
    assert jnp.allclose(out3, ref3, atol=1e-6), "mismatch vs reference (test 3)"

    print("KERNEL_OK")
</pallas_src>

<mosaic_0001>
module attributes {stable_mosaic.version = 11 : i64} {
  func.func @_pe_add_lane_aligned_kernel(%arg0: i32, %arg1: memref<16x256xf32, #tpu.memory_space<vmem>>, %arg2: memref<16x128xf32, #tpu.memory_space<vmem>>, %arg3: memref<16x256xf32, #tpu.memory_space<vmem>>) attributes {dimension_semantics = [#tpu.dimension_semantics<parallel>], iteration_bounds = array<i64: 1>, scalar_prefetch = 0 : i64, scratch_operands = 0 : i64, tpu.core_type = #tpu.core_type<tc>, window_params = [{transform_indices = @transform_0, window_bounds = array<i64: 16, 256>}, {transform_indices = @transform_1, window_bounds = array<i64: 16, 128>}, {transform_indices = @transform_2, window_bounds = array<i64: 16, 256>}]} {
    %c0 = arith.constant 0 : index
    %c0_0 = arith.constant 0 : index
    %0 = vector.load %arg2[%c0, %c0_0] : memref<16x128xf32, #tpu.memory_space<vmem>>, vector<16x128xf32>
    %c0_1 = arith.constant 0 : index
    %c0_2 = arith.constant 0 : index
    %1 = vector.load %arg1[%c0_1, %c0_2] : memref<16x256xf32, #tpu.memory_space<vmem>>, vector<16x128xf32>
    %2 = arith.addf %1, %0 : vector<16x128xf32>
    %c0_3 = arith.constant 0 : index
    %c0_4 = arith.constant 0 : index
    %3 = vector.load %arg3[%c0_3, %c0_4] : memref<16x256xf32, #tpu.memory_space<vmem>>, vector<16x128xf32>
    tpu.vector_store %arg3[%c0_3, %c0_4], %2 {strides = array<i32>} : memref<16x256xf32, #tpu.memory_space<vmem>>, vector<16x128xf32>,
    %c0_5 = arith.constant 0 : index
    %c128 = arith.constant 128 : index
    %4 = vector.load %arg1[%c0_5, %c128] : memref<16x256xf32, #tpu.memory_space<vmem>>, vector<16x128xf32>
    %5 = arith.addf %4, %0 : vector<16x128xf32>
    %c0_6 = arith.constant 0 : index
    %c128_7 = arith.constant 128 : index
    %6 = vector.load %arg3[%c0_6, %c128_7] : memref<16x256xf32, #tpu.memory_space<vmem>>, vector<16x128xf32>
    tpu.vector_store %arg3[%c0_6, %c128_7], %5 {strides = array<i32>} : memref<16x256xf32, #tpu.memory_space<vmem>>, vector<16x128xf32>,
    return
  }
  func.func @transform_0(%arg0: i32) -> (i32, i32) {
    %c0_i32 = arith.constant 0 : i32
    %c0_i32_0 = arith.constant 0 : i32
    return %arg0, %c0_i32 : i32, i32
  }
  func.func @transform_1(%arg0: i32) -> (i32, i32) {
    %c0_i32 = arith.constant 0 : i32
    %c0_i32_0 = arith.constant 0 : i32
    return %arg0, %c0_i32 : i32, i32
  }
  func.func @transform_2(%arg0: i32) -> (i32, i32) {
    %c0_i32 = arith.constant 0 : i32
    %c0_i32_0 = arith.constant 0 : i32
    return %arg0, %c0_i32 : i32, i32
  }
}

</mosaic_0001>

<llo_original>
// kernel: tpu_custom_call.1
$region0: #{tpu_custom_call.1}
  #allocation0 [shape = 'u32[]', space=smem, size = 0x4, offset = 0x4, fixed_abs, tag = 'smem constant byte address 0x4 - core index']
  #allocation1 [shape = 'u32[72,128]{1,0:T(1,128)}', space=vmem, size = 0x9000, scoped, tag = 'internal scratch']
  %s0 = inlined_call_operand.hbm [shape: f32[16,256], index: 0, kind: input, shape index: {}]
  %s1 = inlined_call_operand.hbm [shape: f32[64,128], index: 1, kind: input, shape index: {}]
  %s2 = inlined_call_operand.hbm [shape: f32[16,256], index: 2, kind: output, shape index: {}]
  %s3 = sld [smem:[#allocation0]]
  $region26: #{tpu_custom_call.1} parent=0
    _
  %s5 = ssub.s32 1, %s3
  %s6 = scalar_select 0, %s5, %s3
  $region1: #{tpu_custom_call.1} parent=0
    #allocation2 [shape = 'u8[16384]{0}', space=vmem, size = 0x4000, scoped, tag = 'input window, operand 0, single buffered']
    #allocation3 [shape = 's32[1]{0}', space=sflag, size = 0x4, scoped, tag = 'scoped memory for tpu_custom_call.1']
    #allocation4 [shape = 's32[1]{0}', space=sflag, size = 0x4, scoped, tag = 'scoped memory for tpu_custom_call.1']
    #allocation5 [shape = 'u8[8192]{0}', space=vmem, size = 0x2000, scoped, tag = 'input window, operand 1, single buffered']
    #allocation6 [shape = 's32[1]{0}', space=sflag, size = 0x4, scoped, tag = 'scoped memory for tpu_custom_call.1']
    #allocation7 [shape = 'u8[16384]{0}', space=vmem, size = 0x4000, scoped, tag = 'output window, operand 0, single buffered']
    %7 = vsyncpa [#allocation3], 0
    %8 = vsyncpa [#allocation6], 0
    %9 = vsyncpa [#allocation4], 0
    // Predicated region
    $region2: #{tpu_custom_call.1} parent=1 // pred_check
      _
    $region3: #{tpu_custom_call.1} parent=1 // pred_check_branch
      %11 = sbr.rel (0) target = $region5
    $region4: #{tpu_custom_call.1} parent=1 // pred_region
      %13 = vsyncadd [#allocation3], 0
      %s14 = sshll.u32 %s0, 4
      %s15 = int_to_ptr.hbm [resolvable:$true] %s14
      %s16 = sshll.u32 [#allocation2], 4
      %s17 = int_to_ptr.vmem [resolvable:$true] %s16
      %22 = dma.hbm_to_vmem [thread:$0]  %s15, 512, %s17, [#allocation3], 256, 256, 16
    $region5: #{tpu_custom_call.1} parent=1 // pred_fallthru
      _
    // Predicated region
    $region6: #{tpu_custom_call.1} parent=1 // pred_check
      _
    $region7: #{tpu_custom_call.1} parent=1 // pred_check_branch
      %24 = sbr.rel (0) target = $region9
    $region8: #{tpu_custom_call.1} parent=1 // pred_region
      %26 = vsyncadd [#allocation6], 0
      %s27 = sshll.u32 %s1, 4
      %s28 = int_to_ptr.hbm [resolvable:$true] %s27
      %s29 = sshll.u32 [#allocation5], 4
      %s30 = int_to_ptr.vmem [resolvable:$true] %s29
      %35 = dma.hbm_to_vmem [thread:$0]  %s28, 256, %s30, [#allocation6], 128, 128, 8
    $region9: #{tpu_custom_call.1} parent=1 // pred_fallthru
      _
    // Predicated region
    $region10: #{tpu_custom_call.1} parent=1 // pred_check
      _
    $region11: #{tpu_custom_call.1} parent=1 // pred_check_branch
      %37 = sbr.rel (0) target = $region13
    $region12: #{tpu_custom_call.1} parent=1 // pred_region
      %39 = dma.done [#allocation3], 512
    $region13: #{tpu_custom_call.1} parent=1 // pred_fallthru
      _
    // Predicated region
    $region14: #{tpu_custom_call.1} parent=1 // pred_check
      _
    $region15: #{tpu_custom_call.1} parent=1 // pred_check_branch
      %41 = sbr.rel (0) target = $region17
    $region16: #{tpu_custom_call.1} parent=1 // pred_region
      %43 = dma.done [#allocation6], 256
    $region17: #{tpu_custom_call.1} parent=1 // pred_fallthru
      _
    %v44 = vld [vmem:[#allocation5] sm:$0xff]
    %v45 = vld [vmem:[#allocation5 + $0x8] sm:$0xff]
    %v46 = vld [vmem:[#allocation2] sm:$0xff]
    %v47 = vld [vmem:[#allocation2 + $0x10] sm:$0xff]
    %v48 = vadd.f32 %v46, %v44
    %v49 = vadd.f32 %v47, %v45
    %50 = vst [vmem:[#allocation7] sm:$0xff] %v48
    %51 = vst [vmem:[#allocation7 + $0x10] sm:$0xff] %v49
    %v52 = vld [vmem:[#allocation2 + $0x8] sm:$0xff]
    %v53 = vld [vmem:[#allocation2 + $0x18] sm:$0xff]
    %v54 = vadd.f32 %v52, %v44
    %v55 = vadd.f32 %v53, %v45
    %56 = vst [vmem:[#allocation7 + $0x8] sm:$0xff] %v54
    %57 = vst [vmem:[#allocation7 + $0x18] sm:$0xff] %v55
    // Predicated region
    $region18: #{tpu_custom_call.1} parent=1 // pred_check
      _
    $region19: #{tpu_custom_call.1} parent=1 // pred_check_branch
      %59 = sbr.rel (0) target = $region21
    $region20: #{tpu_custom_call.1} parent=1 // pred_region
      %61 = vsyncadd [#allocation4], 0
      %s62 = sshll.u32 [#allocation7], 4
      %s63 = int_to_ptr.vmem [resolvable:$true] %s62
      %s64 = sshll.u32 %s2, 4
      %s65 = int_to_ptr.hbm [resolvable:$true] %s64
      %70 = dma.vmem_to_hbm [thread:$0]  %s63, 512, %s65, [#allocation4], 256, 256, 16
    $region21: #{tpu_custom_call.1} parent=1 // pred_fallthru
      _
    // Predicated region
    $region22: #{tpu_custom_call.1} parent=1 // pred_check
      _
    $region23: #{tpu_custom_call.1} parent=1 // pred_check_branch
      %72 = sbr.rel (0) target = $region25
    $region24: #{tpu_custom_call.1} parent=1 // pred_region
      %74 = dma.done [#allocation4], 512
    $region25: #{tpu_custom_call.1} parent=1 // pred_fallthru
      _
    %75 = vsyncpa [#allocation3], 1
    %76 = vsyncpa [#allocation6], 1
    %77 = vsyncpa [#allocation4], 1

</llo_original>
